<compile_context>
chip_gen: v7x
topology: tpu7x:2x2x1
jax: 0.10.0
libtpu: 0.0.40
codegen_flags: <defaults>
</compile_context>

<pallas_src>
from functools import partial

import numpy as np
import jax
import jax.numpy as jnp
from jax.experimental import pallas as pl
from jax.experimental.pallas import tpu as pltpu


def _round_up(x, m):
    return ((x + m - 1) // m) * m


def _vmem_limit_bytes():
    # Per-generation scoped-VMEM budget: ~3/4 of physical capacity
    # (~96 MiB on v5e/v6e with 128 MiB VMEM, ~48 MiB on v7x with 64 MiB).
    try:
        cap = int(getattr(pltpu.get_tpu_info(), "vmem_capacity_bytes",
                          128 * 1024 * 1024))
    except Exception:  # query unavailable -> conservative default
        cap = 128 * 1024 * 1024
    return max(32 * 1024 * 1024, (cap * 3) // 4)


_VMEM_LIMIT = _vmem_limit_bytes()


# ----------------------------------------------------------------------------
# Tiled linear:  y = act(x @ w + b)   (bf16 MXU operands, fp32 accumulation)
# ----------------------------------------------------------------------------
def _linear_kernel(x_ref, w_ref, b_ref, o_ref, acc_ref, *, act):
    @pl.when(pl.program_id(2) == 0)
    def _():
        acc_ref[...] = jnp.zeros_like(acc_ref)

    acc_ref[...] += jnp.dot(x_ref[...], w_ref[...],
                            preferred_element_type=jnp.float32)

    @pl.when(pl.program_id(2) == pl.num_programs(2) - 1)
    def _():
        y = acc_ref[...] + b_ref[...]
        if act == "gelu":  # exact (erf) GELU == torch nn.GELU default
            y = 0.5 * y * (1.0 + jax.lax.erf(y * 0.7071067811865476))
        o_ref[...] = y


def linear(x, w, b, act=None):
    """x: (..., K) @ w: (K, N) + b: (N,) -> (..., N) fp32.  Operands bf16."""
    lead = x.shape[:-1]
    K = x.shape[-1]
    N = w.shape[1]
    x2 = x.reshape(-1, K).astype(jnp.bfloat16)
    M = x2.shape[0]

    # Full-dim blocks when small (no padding); 512-aligned tiles when big.
    tm, Mp = (M, M) if M <= 512 else (512, _round_up(M, 512))
    n128 = _round_up(N, 128)                 # lane-dense (unmasked) output stores
    tn, Np = (n128, n128) if n128 <= 512 else (512, _round_up(N, 512))
    tk, Kp = (K, K) if K <= 1024 else (512, _round_up(K, 512))

    if (Mp, Kp) != (M, K):
        x2 = jnp.pad(x2, ((0, Mp - M), (0, Kp - K)))
    w2 = w.astype(jnp.bfloat16)
    if (Kp, Np) != (K, N):
        w2 = jnp.pad(w2, ((0, Kp - K), (0, Np - N)))
    b2 = b.reshape(1, N).astype(jnp.float32)
    if Np != N:
        b2 = jnp.pad(b2, ((0, 0), (0, Np - N)))

    out = pl.pallas_call(
        partial(_linear_kernel, act=act),
        out_shape=jax.ShapeDtypeStruct((Mp, Np), jnp.float32),
        grid=(Mp // tm, Np // tn, Kp // tk),
        in_specs=[
            pl.BlockSpec((tm, tk), lambda i, j, k: (i, k)),
            pl.BlockSpec((tk, tn), lambda i, j, k: (k, j)),
            pl.BlockSpec((1, tn), lambda i, j, k: (0, j)),
        ],
        out_specs=pl.BlockSpec((tm, tn), lambda i, j, k: (i, j)),
        scratch_shapes=[pltpu.VMEM((tm, tn), jnp.float32)],
        compiler_params=pltpu.CompilerParams(
            dimension_semantics=("parallel", "parallel", "arbitrary"),
            vmem_limit_bytes=_VMEM_LIMIT),
        cost_estimate=pl.CostEstimate(
            flops=2 * Mp * Np * Kp,
            transcendentals=Mp * Np if act == "gelu" else 0,
            bytes_accessed=2 * (Mp * Kp + Kp * Np) + 4 * Mp * Np),
    )(x2, w2, b2)
    if (Mp, Np) != (M, N):
        out = out[:M, :N]
    return out.reshape(*lead, N)


# ----------------------------------------------------------------------------
# Tiled layernorm over last dim (fp32 statistics)
# ----------------------------------------------------------------------------
def _layernorm_kernel(x_ref, g_ref, b_ref, o_ref, *, eps):
    x = x_ref[...].astype(jnp.float32)
    mu = jnp.mean(x, axis=-1, keepdims=True)
    xc = x - mu
    var = jnp.mean(xc * xc, axis=-1, keepdims=True)
    o_ref[...] = xc * jax.lax.rsqrt(var + eps) * g_ref[...] + b_ref[...]


def layernorm(x, g, b, eps=1e-5):
    # TODO(synk): the encoder's trailing LayerNorm could be fused into the
    #             following linear to save one activation HBM round-trip.
    lead = x.shape[:-1]
    D = x.shape[-1]
    x2 = x.reshape(-1, D).astype(jnp.float32)
    M = x2.shape[0]
    tm, Mp = (M, M) if M <= 2048 else (1024, _round_up(M, 1024))
    if Mp != M:
        x2 = jnp.pad(x2, ((0, Mp - M), (0, 0)))
    out = pl.pallas_call(
        partial(_layernorm_kernel, eps=eps),
        out_shape=jax.ShapeDtypeStruct((Mp, D), jnp.float32),
        grid=(Mp // tm,),
        in_specs=[
            pl.BlockSpec((tm, D), lambda i: (i, 0)),
            pl.BlockSpec((1, D), lambda i: (0, 0)),
            pl.BlockSpec((1, D), lambda i: (0, 0)),
        ],
        out_specs=pl.BlockSpec((tm, D), lambda i: (i, 0)),
        compiler_params=pltpu.CompilerParams(
            dimension_semantics=("parallel",),
            vmem_limit_bytes=_VMEM_LIMIT),
    )(x2, g.reshape(1, D).astype(jnp.float32), b.reshape(1, D).astype(jnp.float32))
    if Mp != M:
        out = out[:M]
    return out.reshape(*lead, D)


# ----------------------------------------------------------------------------
# Fully fused transformer block (timm Block), bB batch rows per grid step:
#   LN1 -> QKV -> MHA (all heads, K^T hoisted) -> proj -> +res -> LN2 -> MLP -> +res
# ----------------------------------------------------------------------------
def _vit_block_kernel(x_ref, ln1g_ref, ln1b_ref, qkvw_ref, qkvb_ref,
                      projw_ref, projb_ref, ln2g_ref, ln2b_ref,
                      fc1w_ref, fc1b_ref, fc2w_ref, fc2b_ref, o_ref,
                      kt_ref, attn_ref, *, num_heads, eps):
    bB, S, D = x_ref.shape
    dh = D // num_heads
    scale = float(dh) ** -0.5
    M = bB * S

    def ln(v, g, b):
        mu = jnp.mean(v, axis=-1, keepdims=True)
        vc = v - mu
        var = jnp.mean(vc * vc, axis=-1, keepdims=True)
        return vc * jax.lax.rsqrt(var + eps) * g + b

    x = x_ref[...].astype(jnp.float32).reshape(M, D)        # fp32 residual stream

    # ---- attention (pre-norm): QKV over all bB rows at once (MXU-dense) ----
    h = ln(x, ln1g_ref[...], ln1b_ref[...])
    qkv = jnp.dot(h.astype(jnp.bfloat16), qkvw_ref[...],
                  preferred_element_type=jnp.float32) + qkvb_ref[...]   # (M, 3D)
    q = qkv[:, :D].astype(jnp.bfloat16).reshape(bB, S, D)
    v = qkv[:, 2 * D:].astype(jnp.bfloat16).reshape(bB, S, D)
    k = qkv[:, D:2 * D].reshape(bB, S, D)
    # Single hoisted K transpose per row (instead of one per head) -> fewer XLU pushes.
    for b in range(bB):
        kt_ref[b] = k[b].T.astype(jnp.bfloat16)             # (D, S)

    attn_ref[...] = jnp.zeros_like(attn_ref)                # (M, D) fp32 accumulator
    projw = projw_ref[...]                                   # (D, D) bf16
    # TODO(synk): for very large num_heads replace this static loop with
    #             lax.fori_loop(unroll=2) to bound code size / live ranges further.
    for hd in range(num_heads):
        lo, hi = hd * dh, (hd + 1) * dh
        s = jax.lax.dot_general(
            q[:, :, lo:hi], kt_ref[:, lo:hi, :],
            (((2,), (1,)), ((0,), (0,))),
            preferred_element_type=jnp.float32) * scale      # (bB, S, S)
        s = s - jnp.max(s, axis=-1, keepdims=True)
        e = jnp.exp(s)
        p = e * pl.reciprocal(jnp.sum(e, axis=-1, keepdims=True), approx=True)
        oh = jax.lax.dot_general(
            p.astype(jnp.bfloat16), v[:, :, lo:hi],
            (((2,), (1,)), ((0,), (0,))),
            preferred_element_type=jnp.float32)              # (bB, S, dh)
        # concat-free head merge:  attn @ Wp == sum_h  oh_h @ Wp[lo:hi, :]
        attn_ref[...] += jnp.dot(oh.reshape(M, dh).astype(jnp.bfloat16),
                                 projw[lo:hi, :],
                                 preferred_element_type=jnp.float32)
    x = x + attn_ref[...] + projb_ref[...]

    # ---- MLP (pre-norm) ----
    h2 = ln(x, ln2g_ref[...], ln2b_ref[...])
    h2 = jnp.dot(h2.astype(jnp.bfloat16), fc1w_ref[...],
                 preferred_element_type=jnp.float32) + fc1b_ref[...]
    h2 = 0.5 * h2 * (1.0 + jax.lax.erf(h2 * 0.7071067811865476))
    h2 = jnp.dot(h2.astype(jnp.bfloat16), fc2w_ref[...],
                 preferred_element_type=jnp.float32) + fc2b_ref[...]
    o_ref[...] = (x + h2).reshape(bB, S, D)


def _pick_rows_per_step(B, S):
    """Batch rows per grid step so the big matmuls see ~256 MXU rows while
    keeping >= 2 grid steps for the megacore split when possible."""
    target = max(1, 256 // max(S, 1))
    best = 1
    for c in range(1, B + 1):
        if B % c != 0 or c > target:
            continue
        if B // c >= 2 or B == 1:
            best = c
    return best


def vit_block(x, p, num_heads, eps=1e-5):
    B, S, D = x.shape
    x = x.astype(jnp.float32)
    bB = _pick_rows_per_step(B, S)
    hidden = p["fc1_w"].shape[1]

    def row32(a):
        return a.reshape(1, -1).astype(jnp.float32)

    def w16(a):
        return a.astype(jnp.bfloat16)

    # bf16 weights (half the HBM DMA / VMEM residency); fp32 biases & LN params.
    args = [
        row32(p["ln1_g"]), row32(p["ln1_b"]),
        w16(p["qkv_w"]), row32(p["qkv_b"]),
        w16(p["proj_w"]), row32(p["proj_b"]),
        row32(p["ln2_g"]), row32(p["ln2_b"]),
        w16(p["fc1_w"]), row32(p["fc1_b"]),
        w16(p["fc2_w"]), row32(p["fc2_b"]),
    ]
    x_spec = pl.BlockSpec((bB, S, D), lambda i: (i, 0, 0))
    # TODO(synk): for large D (>=768) on v7x, mark the constant weight specs with
    #             pipeline_mode=pl.Buffered(1) (or tile FC1/FC2 over the hidden
    #             dim via pltpu.emit_pipeline) to halve weight VMEM residency.
    param_specs = [pl.BlockSpec(a.shape, lambda i: (0, 0)) for a in args]

    flops = 2 * B * S * D * (3 * D + 2 * S + D + 2 * hidden)
    return pl.pallas_call(
        partial(_vit_block_kernel, num_heads=num_heads, eps=eps),
        out_shape=jax.ShapeDtypeStruct((B, S, D), jnp.float32),
        grid=(B // bB,),
        in_specs=[x_spec] + param_specs,
        out_specs=x_spec,
        scratch_shapes=[pltpu.VMEM((bB, D, S), jnp.bfloat16),     # hoisted K^T
                        pltpu.VMEM((bB * S, D), jnp.float32)],    # attn accumulator
        compiler_params=pltpu.CompilerParams(
            dimension_semantics=("parallel",),
            vmem_limit_bytes=_VMEM_LIMIT),
        cost_estimate=pl.CostEstimate(
            flops=int(flops),
            transcendentals=int(B * S * (S + hidden)),
            bytes_accessed=int(8 * B * S * D
                               + 2 * (3 * D * D + D * D + 2 * D * hidden))),
    )(x, *args)


# ----------------------------------------------------------------------------
# L1 loss: wide lane slab, per-step VPU partial sums, single final reduction
# ----------------------------------------------------------------------------
def _l1_kernel(a_ref, b_ref, o_ref, acc_ref):
    @pl.when(pl.program_id(0) == 0)
    def _():
        acc_ref[...] = jnp.zeros_like(acc_ref)

    tr, c = a_ref.shape
    d = jnp.abs(a_ref[...] - b_ref[...])
    # (8, lanes) partial-sum tile kept in VMEM scratch: pure VPU adds per step.
    acc_ref[...] += jnp.sum(d.reshape(tr // 8, 8, c), axis=0)

    @pl.when(pl.program_id(0) == pl.num_programs(0) - 1)
    def _():
        o_ref[0, 0] = jnp.sum(acc_ref[...])   # single cross-lane reduction at the end


def l1_loss(a, b):
    a1 = a.reshape(-1).astype(jnp.float32)
    b1 = b.reshape(-1).astype(jnp.float32)
    n = a1.shape[0]
    lanes = 512                                # wide lane slab -> dense DMA/stores
    rows = pl.cdiv(n, lanes)
    tr = _round_up(rows, 8) if rows <= 2048 else 1024
    rows_p = _round_up(rows, tr)
    npad = rows_p * lanes
    if npad != n:
        a1 = jnp.pad(a1, (0, npad - n))
        b1 = jnp.pad(b1, (0, npad - n))
    a2 = a1.reshape(rows_p, lanes)
    b2 = b1.reshape(rows_p, lanes)
    out = pl.pallas_call(
        _l1_kernel,
        out_shape=jax.ShapeDtypeStruct((1, 1), jnp.float32),
        grid=(rows_p // tr,),
        in_specs=[
            pl.BlockSpec((tr, lanes), lambda i: (i, 0)),
            pl.BlockSpec((tr, lanes), lambda i: (i, 0)),
        ],
        out_specs=pl.BlockSpec((1, 1), lambda i: (0, 0)),
        scratch_shapes=[pltpu.VMEM((8, lanes), jnp.float32)],
        compiler_params=pltpu.CompilerParams(
            dimension_semantics=("arbitrary",),
            vmem_limit_bytes=_VMEM_LIMIT),
    )(a2, b2)
    return out[0, 0] / n    # padded zeros contribute 0; divide by true count


# ----------------------------------------------------------------------------
# sincos positional embedding (as in MAE)
# ----------------------------------------------------------------------------
def _get_1d_sincos(embed_dim, pos):
    omega = np.arange(embed_dim // 2, dtype=np.float64) / (embed_dim / 2.0)
    omega = 1.0 / 10000 ** omega
    out = np.einsum("m,d->md", pos.reshape(-1).astype(np.float64), omega)
    return np.concatenate([np.sin(out), np.cos(out)], axis=1)


def get_2d_sincos_pos_embed(embed_dim, grid_size, cls_token=False):
    gh = np.arange(grid_size, dtype=np.float32)
    gw = np.arange(grid_size, dtype=np.float32)
    grid = np.meshgrid(gw, gh)
    grid = np.stack(grid, axis=0).reshape(2, 1, grid_size, grid_size)
    emb_h = _get_1d_sincos(embed_dim // 2, grid[0])
    emb_w = _get_1d_sincos(embed_dim // 2, grid[1])
    emb = np.concatenate([emb_h, emb_w], axis=1)
    if cls_token:
        emb = np.concatenate([np.zeros([1, embed_dim]), emb], axis=0)
    return emb.astype(np.float32)


# ----------------------------------------------------------------------------
# Model: parameters (matmul weights stored in bf16, everything else fp32)
# ----------------------------------------------------------------------------
def init_params(key, cfg):
    D, Dd = cfg["embed_dim"], cfg["dec_embed_dim"]
    p, C = cfg["patch_size"], cfg["in_chans"]
    num_patches = (cfg["img_size"] * 2 // p) ** 2
    mlp = int(D * cfg["mlp_ratio"])
    dmlp = int(Dd * cfg["mlp_ratio"])
    keys = iter(jax.random.split(key, 256))

    def w(shape, scale=0.02):
        return (scale * jax.random.normal(next(keys), shape)).astype(jnp.bfloat16)

    def wf32(shape, scale=0.02):
        return (scale * jax.random.normal(next(keys), shape)).astype(jnp.float32)

    zeros = lambda s: jnp.zeros(s, jnp.float32)
    ones = lambda s: jnp.ones(s, jnp.float32)

    def block_params(dim, hidden):
        return {
            "ln1_g": ones((dim,)), "ln1_b": zeros((dim,)),
            "qkv_w": w((dim, 3 * dim)), "qkv_b": zeros((3 * dim,)),
            "proj_w": w((dim, dim)), "proj_b": zeros((dim,)),
            "ln2_g": ones((dim,)), "ln2_b": zeros((dim,)),
            "fc1_w": w((dim, hidden)), "fc1_b": zeros((hidden,)),
            "fc2_w": w((hidden, dim)), "fc2_b": zeros((dim,)),
        }

    return {
        "pe_w": w((C * p * p, D)), "pe_b": zeros((D,)),
        "cls_token": wf32((1, 1, D)),
        "pos_embed": jnp.asarray(
            get_2d_sincos_pos_embed(D, int(num_patches ** 0.5), cls_token=True))[None],
        "enc_blocks": [block_params(D, mlp) for _ in range(cfg["depth"])],
        "norm_g": ones((D,)), "norm_b": zeros((D,)),
        "proj_layers": [(w((D, D)), zeros((D,))) for _ in cfg["out_indices"]],
        "proj_weights": ones((len(cfg["out_indices"]) + 1,)),
        "dec_head_w": w((D * (cfg["chunks"] - 1), Dd)), "dec_head_b": zeros((Dd,)),
        "dec_embed_w": w((D, Dd)), "dec_embed_b": zeros((Dd,)),
        "dec_embed_norm_g": ones((Dd,)), "dec_embed_norm_b": zeros((Dd,)),
        "mask_token": wf32((1, 1, Dd)),
        "dec_pos_embed": jnp.asarray(
            get_2d_sincos_pos_embed(Dd, int(num_patches ** 0.5), cls_token=True))[None],
        "dec_blocks": [block_params(Dd, dmlp) for _ in range(cfg["dec_depth"])],
        "dec_norm_g": ones((Dd,)), "dec_norm_b": zeros((Dd,)),
        "dec_pred_w": w((Dd, p * p * C)), "dec_pred_b": zeros((p * p * C,)),
    }


# ----------------------------------------------------------------------------
# Model: forward pieces
# ----------------------------------------------------------------------------
def forward_encoder(params, x, cfg):
    B, _, D = x.shape
    cls = params["cls_token"] + params["pos_embed"][:, :1, :]
    cls = jnp.broadcast_to(cls, (B, 1, D))
    x = jnp.concatenate([cls, x], axis=1)
    res = []
    for i, blk in enumerate(params["enc_blocks"]):
        x = vit_block(x, blk, cfg["num_heads"])
        if i in cfg["out_indices"]:
            j = list(cfg["out_indices"]).index(i)
            pw, pb = params["proj_layers"][j]
            res.append(linear(x, pw, pb))
    res.append(x)
    res = jnp.stack(res)                                      # (n, B, S, D)
    w = jax.nn.softmax(params["proj_weights"], axis=0).reshape(-1, 1, 1, 1)
    res = (res * w).sum(axis=0)
    return layernorm(res, params["norm_g"], params["norm_b"])


def forward_decoder(params, x, head, ids_restore, index_pos, cfg):
    N, L, D = x.shape
    chunks = cfg["chunks"]
    recon_L = L // chunks
    ids_shuffle = jnp.argsort(ids_restore, axis=1)

    x = linear(x, params["dec_embed_w"], params["dec_embed_b"])
    x = layernorm(x, params["dec_embed_norm_g"], params["dec_embed_norm_b"])  # (N, L, Dd)

    # head: (N*chunks, 1, D) -> per decoder row i*N+b concat of all chunk heads j != i
    head = head.reshape(N, chunks, D)
    heads = []
    for i in range(chunks):
        idx = [j for j in range(chunks) if j != i]
        heads.append(head[:, idx, :].reshape(N, 1, (chunks - 1) * D))
    head_cat = jnp.concatenate(heads, axis=0)                      # (chunks*N, 1, (chunks-1)*D)
    head_emb = linear(head_cat, params["dec_head_w"], params["dec_head_b"])
    head_emb = head_emb + params["dec_pos_embed"][:, :1, :]

    # replicate tokens, mask chunk i (shuffled order) with mask_token in copy i
    # TODO(synk): these gathers / masked sets could be folded into the first
    #             decoder kernel's DMA via PrefetchScalarGridSpec + pl.Element.
    x_rep = jnp.tile(x, (chunks, 1, 1))                            # row i*N+b = x[b]
    mask_token = params["mask_token"][0, 0]
    pos_idx = jnp.arange(L)
    for i in range(chunks):
        in_mask = (pos_idx >= recon_L * i) & (pos_idx < recon_L * (i + 1))
        seg = jnp.where(in_mask[None, :, None], mask_token[None, None, :],
                        x_rep[N * i:N * i + N])
        x_rep = x_rep.at[N * i:N * i + N].set(seg)

    # un-shuffle
    ids_restore_rep = jnp.tile(ids_restore, (chunks, 1))
    x_rep = jnp.take_along_axis(x_rep, ids_restore_rep[..., None], axis=1)

    # add decoder pos embed (gathered window)
    dec_pos = params["dec_pos_embed"][0]
    index_pos_rep = jnp.tile(index_pos, (chunks, 1))
    x_rep = x_rep + dec_pos[1:][index_pos_rep]

    xx = jnp.concatenate([head_emb, x_rep], axis=1)                # (chunks*N, 1+L, Dd)
    for blk in params["dec_blocks"]:
        xx = vit_block(xx, blk, cfg["dec_num_heads"])
    xx = xx[:, 1:, :]
    xx = layernorm(xx, params["dec_norm_g"], params["dec_norm_b"])

    # collect each chunk's (masked) positions from its own decoder copy
    xs = []
    for i in range(chunks):
        idx_i = ids_shuffle[:, recon_L * i:recon_L * (i + 1)]
        xs.append(jnp.take_along_axis(xx[N * i:N * i + N], idx_i[..., None], axis=1))
    xcat = jnp.concatenate(xs, axis=1)                             # (N, L, Dd) shuffled order
    xcat = jnp.take_along_axis(xcat, ids_restore[..., None], axis=1)
    return linear(xcat, params["dec_pred_w"], params["dec_pred_b"])  # (N, L, p*p*C)


def model_forward(params, imgs, key_mask, cfg):
    N = imgs.shape[0]
    p = cfg["patch_size"]
    C = cfg["in_chans"]
    D = cfg["embed_dim"]
    chunks = cfg["chunks"]
    H = imgs.shape[2]
    h = H // p
    L = h * h

    # --- patch embed: conv(k=p, stride=p) == patchify (c, ph, pw) + matmul ---
    patches = imgs.reshape(N, C, h, p, h, p).transpose(0, 2, 4, 1, 3, 5).reshape(N, L, C * p * p)
    x = linear(patches, params["pe_w"], params["pe_b"])            # (N, L, D)

    # --- get_index_pos (eval mode: fixed center offset) ---
    num_test = params["pos_embed"].shape[1] - 1
    h_test = int(round(num_test ** 0.5))
    delta = h_test - h + 1
    r = delta // 2
    cols = jnp.arange(h)
    xi = jnp.tile(cols[None, :], (h, 1))
    yi = xi.T
    ip = jnp.arange(num_test).reshape(h_test, h_test)
    index_pos = jnp.tile(ip[yi + r, xi + r].reshape(1, L), (N, 1))  # (N, L)

    # --- add_pos_embed ---
    x = x + params["pos_embed"][0, 1:][index_pos]

    # --- random masking ---
    noise = jax.random.uniform(key_mask, (N, L))
    ids_shuffle = jnp.argsort(noise, axis=1)
    ids_restore = jnp.argsort(ids_shuffle, axis=1)
    x_shuf = jnp.take_along_axis(x, ids_shuffle[..., None], axis=1)
    x_masked = x_shuf.reshape(N * chunks, L // chunks, D)

    # --- encoder (multi-feature fusion) ---
    latent = forward_encoder(params, x_masked, cfg)                # (N*chunks, 1+L/ch, D)
    latent_head = latent[:, :1, :]
    latent_seq = latent[:, 1:, :].reshape(N, L, D)

    # --- decoder ---
    pred = forward_decoder(params, latent_seq, latent_head, ids_restore, index_pos, cfg)

    # --- loss (L1 over patchified target, ordering nhwpqc) ---
    target = imgs.reshape(N, C, h, p, h, p).transpose(0, 2, 4, 3, 5, 1).reshape(N, L, p * p * C)
    loss = l1_loss(pred, target)
    return loss, pred, {"loss": loss}


# ----------------------------------------------------------------------------
if __name__ == "__main__":
    cfg = dict(
        img_size=16, patch_size=4, in_chans=3, embed_dim=32, depth=2,
        num_heads=4, dec_embed_dim=32, dec_depth=1, dec_num_heads=4,
        mlp_ratio=4.0, chunks=4, out_indices=(0,),
    )
    key = jax.random.PRNGKey(0)
    kp, ki, km = jax.random.split(key, 3)
    params = init_params(kp, cfg)
    imgs = jax.random.normal(ki, (2, cfg["in_chans"], cfg["img_size"], cfg["img_size"]),
                             dtype=jnp.float32)

    loss, pred, show_loss = model_forward(params, imgs, km, cfg)
    jax.block_until_ready((loss, pred))

    assert pred.shape == (2, 16, cfg["patch_size"] ** 2 * cfg["in_chans"])
    assert bool(jnp.isfinite(loss)) and bool(jnp.all(jnp.isfinite(pred)))
    print("KERNEL_OK")
</pallas_src>

<mosaic_0001>
module attributes {stable_mosaic.version = 11 : i64} {
  func.func @_linear_kernel(%arg0: i32, %arg1: i32, %arg2: i32, %arg3: memref<32x48xbf16, #tpu.memory_space<vmem>>, %arg4: memref<48x128xbf16, #tpu.memory_space<vmem>>, %arg5: memref<1x128xf32, #tpu.memory_space<vmem>>, %arg6: memref<32x128xf32, #tpu.memory_space<vmem>>, %arg7: memref<32x128xf32, #tpu.memory_space<vmem>>) attributes {dimension_semantics = [#tpu.dimension_semantics<parallel>, #tpu.dimension_semantics<parallel>, #tpu.dimension_semantics<arbitrary>], iteration_bounds = array<i64: 1, 1, 1>, scalar_prefetch = 0 : i64, scratch_operands = 1 : i64, tpu.core_type = #tpu.core_type<tc>, window_params = [{transform_indices = @transform_0, window_bounds = array<i64: 32, 48>}, {transform_indices = @transform_1, window_bounds = array<i64: 48, 128>}, {transform_indices = @transform_2, window_bounds = array<i64: 1, 128>}, {transform_indices = @transform_3, window_bounds = array<i64: 32, 128>}]} {
    %c0_i32 = arith.constant 0 : i32
    %0 = arith.cmpi eq, %arg2, %c0_i32 : i32
    %1 = arith.extui %0 : i1 to i32
    %c0_i32_0 = arith.constant 0 : i32
    %2 = arith.cmpi ne, %1, %c0_i32_0 : i32
    scf.if %2 {
      %cst_10 = arith.constant 0.000000e+00 : f32
      %12 = vector.broadcast %cst_10 : f32 to vector<32x128xf32>
      %c0_11 = arith.constant 0 : index
      %c0_12 = arith.constant 0 : index
      %13 = vector.load %arg7[%c0_11, %c0_12] : memref<32x128xf32, #tpu.memory_space<vmem>>, vector<32x128xf32>
      tpu.vector_store %arg7[%c0_11, %c0_12], %12 {strides = array<i32>} : memref<32x128xf32, #tpu.memory_space<vmem>>, vector<32x128xf32>,
    } else {
    }
    %c0 = arith.constant 0 : index
    %c0_1 = arith.constant 0 : index
    %3 = vector.load %arg7[%c0, %c0_1] : memref<32x128xf32, #tpu.memory_space<vmem>>, vector<32x128xf32>
    %c0_2 = arith.constant 0 : index
    %c0_3 = arith.constant 0 : index
    %4 = vector.load %arg3[%c0_2, %c0_3] : memref<32x48xbf16, #tpu.memory_space<vmem>>, vector<32x48xbf16>
    %c0_4 = arith.constant 0 : index
    %c0_5 = arith.constant 0 : index
    %5 = vector.load %arg4[%c0_4, %c0_5] : memref<48x128xbf16, #tpu.memory_space<vmem>>, vector<48x128xbf16>
    %cst = arith.constant dense<0.000000e+00> : vector<32x128xf32>
    %6 = tpu.matmul %4, %5, %cst {dimension_numbers = #tpu.dot_dimension_numbers<[1], [0], [0], [1], [0, 0, 1, 1], [], []>} : vector<32x48xbf16>, vector<48x128xbf16>, vector<32x128xf32> -> vector<32x128xf32>
    %7 = arith.addf %3, %6 : vector<32x128xf32>
    %c0_6 = arith.constant 0 : index
    %c0_7 = arith.constant 0 : index
    %8 = vector.load %arg7[%c0_6, %c0_7] : memref<32x128xf32, #tpu.memory_space<vmem>>, vector<32x128xf32>
    tpu.vector_store %arg7[%c0_6, %c0_7], %7 {strides = array<i32>} : memref<32x128xf32, #tpu.memory_space<vmem>>, vector<32x128xf32>,
    %c0_i32_8 = arith.constant 0 : i32
    %9 = arith.cmpi eq, %arg2, %c0_i32_8 : i32
    %10 = arith.extui %9 : i1 to i32
    %c0_i32_9 = arith.constant 0 : i32
    %11 = arith.cmpi ne, %10, %c0_i32_9 : i32
    scf.if %11 {
      %c0_10 = arith.constant 0 : index
      %c0_11 = arith.constant 0 : index
      %12 = vector.load %arg7[%c0_10, %c0_11] : memref<32x128xf32, #tpu.memory_space<vmem>>, vector<32x128xf32>
      %c0_12 = arith.constant 0 : index
      %c0_13 = arith.constant 0 : index
      %13 = vector.load %arg5[%c0_12, %c0_13] : memref<1x128xf32, #tpu.memory_space<vmem>>, vector<1x128xf32>
      %14 = vector.broadcast %13 : vector<1x128xf32> to vector<32x128xf32>
      %15 = arith.addf %12, %14 : vector<32x128xf32>
      %c0_14 = arith.constant 0 : index
      %c0_15 = arith.constant 0 : index
      %16 = vector.load %arg6[%c0_14, %c0_15] : memref<32x128xf32, #tpu.memory_space<vmem>>, vector<32x128xf32>
      tpu.vector_store %arg6[%c0_14, %c0_15], %15 {strides = array<i32>} : memref<32x128xf32, #tpu.memory_space<vmem>>, vector<32x128xf32>,
    } else {
    }
    return
  }
  func.func @transform_0(%arg0: i32, %arg1: i32, %arg2: i32) -> (i32, i32) {
    %c0_i32 = arith.constant 0 : i32
    return %arg0, %arg2 : i32, i32
  }
  func.func @transform_1(%arg0: i32, %arg1: i32, %arg2: i32) -> (i32, i32) {
    %c0_i32 = arith.constant 0 : i32
    return %arg2, %arg1 : i32, i32
  }
  func.func @transform_2(%arg0: i32, %arg1: i32, %arg2: i32) -> (i32, i32) {
    %c0_i32 = arith.constant 0 : i32
    %c0_i32_0 = arith.constant 0 : i32
    return %c0_i32, %arg1 : i32, i32
  }
  func.func @transform_3(%arg0: i32, %arg1: i32, %arg2: i32) -> (i32, i32) {
    %c0_i32 = arith.constant 0 : i32
    return %arg0, %arg1 : i32, i32
  }
}

</mosaic_0001>

<llo_original>
// kernel: tpu_custom_call.1
$region0: #{tpu_custom_call.1}
  #allocation0 [shape = 'u32[]', space=smem, size = 0x4, offset = 0x4, fixed_abs, tag = 'smem constant byte address 0x4 - core index']
  #allocation1 [shape = 'u32[144,128]{1,0:T(1,128)}', space=vmem, size = 0x12000, scoped, tag = 'internal scratch']
  #allocation2 [shape = 'f32[32,128]{1,0:T(8,128)}', space=vmem, size = 0x4000, scoped, tag = 'scratch operand']
  %s0 = inlined_call_operand.hbm [shape: bf16[32,48], index: 0, kind: input, shape index: {}]
  %s1 = inlined_call_operand.hbm [shape: bf16[48,128], index: 1, kind: input, shape index: {}]
  %s2 = inlined_call_operand.hbm [shape: f32[1,128], index: 2, kind: input, shape index: {}]
  %s3 = inlined_call_operand.hbm [shape: f32[32,128], index: 3, kind: output, shape index: {}]
  %s4 = sld [smem:[#allocation0]]
  $region42: #{tpu_custom_call.1} parent=0
    _
  %s6 = ssub.s32 1, %s4
  %s7 = scalar_select 0, %s6, %s4
  $region1: #{tpu_custom_call.1} parent=0
    #allocation3 [shape = 'u8[8192]{0}', space=vmem, size = 0x2000, scoped, tag = 'input window, operand 0, single buffered']
    #allocation4 [shape = 's32[1]{0}', space=sflag, size = 0x4, scoped, tag = 'scoped memory for tpu_custom_call.1']
    #allocation5 [shape = 's32[1]{0}', space=sflag, size = 0x4, scoped, tag = 'scoped memory for tpu_custom_call.1']
    #allocation6 [shape = 'u8[12288]{0}', space=vmem, size = 0x3000, scoped, tag = 'input window, operand 1, single buffered']
    #allocation7 [shape = 's32[1]{0}', space=sflag, size = 0x4, scoped, tag = 'scoped memory for tpu_custom_call.1']
    #allocation8 [shape = 'u8[512]{0}', space=vmem, size = 0x400, scoped, tag = 'input window, operand 2, single buffered']
    #allocation9 [shape = 'u8[16384]{0}', space=vmem, size = 0x4000, scoped, tag = 'output window, operand 0, single buffered']
    %8 = vsyncpa [#allocation4], 0
    %9 = vsyncpa [#allocation7], 0
    %10 = vsyncpa [#allocation5], 0
    // Predicated region
    $region2: #{tpu_custom_call.1} parent=1 // pred_check
      _
    $region3: #{tpu_custom_call.1} parent=1 // pred_check_branch
      %12 = sbr.rel (0) target = $region5
    $region4: #{tpu_custom_call.1} parent=1 // pred_region
      %s14 = ssub.s32 256, 256
      %15 = vsyncadd [#allocation4], %s14
      %s16 = sshll.u32 [#allocation3], 4
      %s17 = int_to_ptr.vmem [resolvable:$true] %s16
      %22 = dma.hbm_to_vmem [thread:$0]  %s0, 256, %s17, [#allocation4], 64, 64, 4
    $region5: #{tpu_custom_call.1} parent=1 // pred_fallthru
      _
    // Predicated region
    $region6: #{tpu_custom_call.1} parent=1 // pred_check
      _
    $region7: #{tpu_custom_call.1} parent=1 // pred_check_branch
      %24 = sbr.rel (0) target = $region9
    $region8: #{tpu_custom_call.1} parent=1 // pred_region
      %s26 = ssub.s32 384, 384
      %27 = vsyncadd [#allocation7], %s26
      %s28 = sshll.u32 [#allocation6], 4
      %s29 = int_to_ptr.vmem [resolvable:$true] %s28
      %34 = dma.hbm_to_vmem [thread:$0]  %s1, 384, %s29, [#allocation7], 64, 64, 4
    $region9: #{tpu_custom_call.1} parent=1 // pred_fallthru
      _
    // Predicated region
    $region10: #{tpu_custom_call.1} parent=1 // pred_check
      _
    $region11: #{tpu_custom_call.1} parent=1 // pred_check_branch
      %36 = sbr.rel (0) target = $region13
    $region12: #{tpu_custom_call.1} parent=1 // pred_region
      %s38 = ssub.s32 16, 16
      %39 = vsyncadd [#allocation7], %s38
      %s41 = sshll.u32 [#allocation8], 4
      %s42 = int_to_ptr.vmem [resolvable:$true] %s41
      %44 = dma.hbm_to_vmem [thread:$0]  %s2, 16, %s42, [#allocation7]
    $region13: #{tpu_custom_call.1} parent=1 // pred_fallthru
      _
    // Predicated region
    $region14: #{tpu_custom_call.1} parent=1 // pred_check
      _
    $region15: #{tpu_custom_call.1} parent=1 // pred_check_branch
      %46 = sbr.rel (0) target = $region17
    $region16: #{tpu_custom_call.1} parent=1 // pred_region
      %47 = dma.done [#allocation4], 256
    $region17: #{tpu_custom_call.1} parent=1 // pred_fallthru
      _
    // Predicated region
    $region18: #{tpu_custom_call.1} parent=1 // pred_check
      _
    $region19: #{tpu_custom_call.1} parent=1 // pred_check_branch
      %49 = sbr.rel (0) target = $region21
    $region20: #{tpu_custom_call.1} parent=1 // pred_region
      %50 = dma.done [#allocation7], 384
    $region21: #{tpu_custom_call.1} parent=1 // pred_fallthru
      _
    // Predicated region
    $region22: #{tpu_custom_call.1} parent=1 // pred_check
      _
    $region23: #{tpu_custom_call.1} parent=1 // pred_check_branch
      %52 = sbr.rel (0) target = $region25
    $region24: #{tpu_custom_call.1} parent=1 // pred_region
      %53 = dma.done [#allocation7], 16
    $region25: #{tpu_custom_call.1} parent=1 // pred_fallthru
      _
    %p55 = scmp.eq.s32.totalorder 0, 0
    // Predicated region
    $region26: #{tpu_custom_call.1} parent=1 // pred_check
      %p56 = pneg %p55
    $region27: #{tpu_custom_call.1} parent=1 // pred_check_branch
      %58 = sbr.rel (%p56) target = $region29
    $region28: #{tpu_custom_call.1} parent=1 // pred_region
      %59 = vst [vmem:[#allocation2] sm:$0xff] 0.0
      %60 = vst [vmem:[#allocation2 + $0x8] sm:$0xff] 0.0
      %61 = vst [vmem:[#allocation2 + $0x10] sm:$0xff] 0.0
      %62 = vst [vmem:[#allocation2 + $0x18] sm:$0xff] 0.0
    $region29: #{tpu_custom_call.1} parent=1 // pred_fallthru
      _
    %v63 = vld [vmem:[#allocation2] sm:$0xff]
    %v64 = vld [vmem:[#allocation2 + $0x8] sm:$0xff]
    %v65 = vld [vmem:[#allocation2 + $0x10] sm:$0xff]
    %v66 = vld [vmem:[#allocation2 + $0x18] sm:$0xff]
    %v67 = vld [vmem:[#allocation3] sm:$0xf]
    %v68 = vld [vmem:[#allocation3 + $0x4] sm:$0xf]
    %v69 = vld [vmem:[#allocation3 + $0x8] sm:$0xf]
    %v70 = vld [vmem:[#allocation3 + $0xc] sm:$0xf]
    %v71 = vld [vmem:[#allocation6] sm:$0xf]
    %v72 = vld [vmem:[#allocation6 + $0x4] sm:$0xf]
    %v73 = vld [vmem:[#allocation6 + $0x8] sm:$0xf]
    %v74 = vld [vmem:[#allocation6 + $0xc] sm:$0xf]
    %v75 = vld [vmem:[#allocation6 + $0x10] sm:$0xf]
    %v76 = vld [vmem:[#allocation6 + $0x14] sm:$0xf]
    %v81 = vunpack.c.l.b16 %v67
    %v82 = vunpack.c.l.b16 %v68
    %v83 = vunpack.c.l.b16 %v69
    %v84 = vunpack.c.l.b16 %v70
    %v85 = vpack.c.b16 %v82, %v81
    %v86 = vpack.c.b16 %v84, %v83
    %v93 = vunpack.c.l.b16 %v71
    %v94 = vunpack.c.l.b16 %v72
    %v95 = vunpack.c.l.b16 %v73
    %v96 = vunpack.c.l.b16 %v74
    %v97 = vunpack.c.l.b16 %v75
    %v98 = vunpack.c.l.b16 %v76
    %v99 = vpack.c.b16 %v94, %v93
    %v100 = vpack.c.b16 %v96, %v95
    %v101 = vpack.c.b16 %v98, %v97
    %vm105 = vcmask 392192
    %v107 = vsel %vm105, %v85, 0
    %v110 = vsel %vm105, %v86, 0
    %112 = vmatprep.subr.bf16.mxu0 0
    %113 = vmatpush1.bf16.msra.mxu0 %v99
    %114 = vmatprep.subr.bf16.mxu0 0
    %115 = vmatpush1.bf16.msra.mxu0 %v100
    %116 = vmatprep.subr.bf16.mxu0 0
    %117 = vmatpush1.bf16.msra.mxu0 %v101
    %118 = vmatprep.subr.bf16.mxu0 0
    %119 = vmatpush1.bf16.msra.mxu0 0
    %120 = vmatprep.subr.bf16.mxu0 0
    %121 = vmatpush1.bf16.msra.mxu0 0
    %122 = vmatprep.subr.bf16.mxu0 0
    %123 = vmatpush1.bf16.msra.mxu0 0
    %124 = vmatprep.subr.bf16.mxu0 0
    %125 = vmatpush1.bf16.msra.mxu0 0
    %126 = vmatprep.subr.bf16.mxu0 0
    %127 = vmatpush1.bf16.msra.mxu0 0
    %128 = vmatprep.subr.bf16.mxu0 0
    %129 = vmatpush1.bf16.msra.mxu0 0
    %130 = vmatprep.subr.bf16.mxu0 0
    %131 = vmatpush1.bf16.msra.mxu0 0
    %132 = vmatprep.subr.bf16.mxu0 0
    %133 = vmatpush1.bf16.msra.mxu0 0
    %134 = vmatprep.subr.bf16.mxu0 0
    %135 = vmatpush1.bf16.msra.mxu0 0
    %136 = vmatprep.subr.bf16.mxu0 0
    %137 = vmatpush1.bf16.msra.mxu0 0
    %138 = vmatprep.subr.bf16.mxu0 0
    %139 = vmatpush1.bf16.msra.mxu0 0
    %140 = vmatprep.subr.bf16.mxu0 0
    %141 = vmatpush1.bf16.msra.mxu0 0
    %142 = vmatprep.subr.bf16.mxu0 0
    %143 = vmatpush1.bf16.msra.mxu0 0
    %144 = vmatprep.mubr.bf16.mxu0 0
    %145 = vmatmul.mubr.bf16.gmra.mrb[0].mxu0 %v107
    %v146 = vpop.f32.mrb[0].mxu0
    %v147 = vadd.f32 0.0, %v146
    %v148 = vpop.f32.mrb[0].mxu0
    %v149 = vpop.f32.mrb[0].mxu0
    %v150 = vadd.f32 0.0, %v149
    %v151 = vpop.f32.mrb[0].mxu0
    %152 = vmatprep.mubr.bf16.mxu0 0
    %153 = vmatmul.mubr.bf16.gmra.mrb[0].mxu0 %v110
    %v154 = vpop.f32.mrb[0].mxu0
    %v155 = vadd.f32 0.0, %v154
    %v156 = vpop.f32.mrb[0].mxu0
    %v157 = vpop.f32.mrb[0].mxu0
    %v158 = vadd.f32 0.0, %v157
    %v159 = vpop.f32.mrb[0].mxu0
    %160 = vdwg.mxu0
    %v161 = vadd.f32 %v63, %v147
    %v162 = vadd.f32 %v64, %v150
    %v163 = vadd.f32 %v65, %v155
    %v164 = vadd.f32 %v66, %v158
    %165 = vst [vmem:[#allocation2] sm:$0xff] %v161
    %166 = vst [vmem:[#allocation2 + $0x8] sm:$0xff] %v162
    %167 = vst [vmem:[#allocation2 + $0x10] sm:$0xff] %v163
    %168 = vst [vmem:[#allocation2 + $0x18] sm:$0xff] %v164
    // Predicated region
    $region30: #{tpu_custom_call.1} parent=1 // pred_check
      %p169 = pneg %p55
    $region31: #{tpu_custom_call.1} parent=1 // pred_check_branch
      %171 = sbr.rel (%p169) target = $region33
    $region32: #{tpu_custom_call.1} parent=1 // pred_region
      %v172 = vld [vmem:[#allocation2] sm:$0xff]
      %v173 = vld [vmem:[#allocation2 + $0x8] sm:$0xff]
      %v174 = vld [vmem:[#allocation2 + $0x10] sm:$0xff]
      %v175 = vld [vmem:[#allocation2 + $0x18] sm:$0xff]
      %v176 = vld [vmem:[#allocation8] sm:$0x1]
      %v178 = vlaneseq
      %v179 = vshrl.u32 %v178, 7
      %v180 = vsub.s32 0, %v179
      %v181 = vrot.slane %v176, %v180
      %v183 = vadd.f32 %v172, %v181
      %v184 = vadd.f32 %v173, %v181
      %v185 = vadd.f32 %v174, %v181
      %v186 = vadd.f32 %v175, %v181
      %187 = vst [vmem:[#allocation9] sm:$0xff] %v183
      %188 = vst [vmem:[#allocation9 + $0x8] sm:$0xff] %v184
      %189 = vst [vmem:[#allocation9 + $0x10] sm:$0xff] %v185
      %190 = vst [vmem:[#allocation9 + $0x18] sm:$0xff] %v186
    $region33: #{tpu_custom_call.1} parent=1 // pred_fallthru
      _
    // Predicated region
    $region34: #{tpu_custom_call.1} parent=1 // pred_check
      _
    $region35: #{tpu_custom_call.1} parent=1 // pred_check_branch
      %192 = sbr.rel (0) target = $region37
    $region36: #{tpu_custom_call.1} parent=1 // pred_region
      %s194 = ssub.s32 512, 512
      %195 = vsyncadd [#allocation5], %s194
      %s196 = sshll.u32 [#allocation9], 4
      %s197 = int_to_ptr.vmem [resolvable:$true] %s196
      %202 = dma.vmem_to_hbm [thread:$0]  %s197, 512, %s3, [#allocation5], 128, 128, 8
    $region37: #{tpu_custom_call.1} parent=1 // pred_fallthru
      _
    // Predicated region
    $region38: #{tpu_custom_call.1} parent=1 // pred_check
      _
    $region39: #{tpu_custom_call.1} parent=1 // pred_check_branch
      %204 = sbr.rel (0) target = $region41
    $region40: #{tpu_custom_call.1} parent=1 // pred_region
      %205 = dma.done [#allocation5], 512
    $region41: #{tpu_custom_call.1} parent=1 // pred_fallthru
      _
    %206 = vsyncpa [#allocation4], 1
    %207 = vsyncpa [#allocation7], 1
    %208 = vsyncpa [#allocation5], 1

</llo_original>
